<compile_context>
chip_gen: v7x
topology: tpu7x:2x2x1
jax: 0.10.0
libtpu: 0.0.40
codegen_flags: <defaults>
</compile_context>

<pallas_src>
import jax
import jax.numpy as jnp
from jax import lax
from jax.experimental import pallas as pl
from jax.experimental.pallas import tpu as pltpu


def _round_up(x, m):
    return ((x + m - 1) // m) * m


# --------------------------------------------------------------------------
# Small-C path: batch on lanes. logits (C, B_TILE), target/weights (1, B_TILE)
# --------------------------------------------------------------------------
def _iw_ce_lanes_kernel(logits_ref, target_ref, weights_ref, loss_ref):
    x = logits_ref[...].astype(jnp.float32)            # (C, Bt)
    tgt = target_ref[...]                               # (1, Bt) int32
    w = weights_ref[...].astype(jnp.float32)            # (1, Bt)

    c = jnp.max(x, axis=0, keepdims=True)               # (1, Bt)
    xc = x - c                                           # shifted logits, reused
    sum_exp = jnp.sum(jnp.exp(xc), axis=0, keepdims=True)  # (1, Bt)

    # select_target_class: one-hot over the class (sublane) axis, on xc so the
    # max shift cancels:  lse - sel = log(sum_exp) - (sel - c) = log(sum_exp) - sel_c
    class_ids = lax.broadcasted_iota(jnp.int32, x.shape, dimension=0)
    sel_c = jnp.sum(jnp.where(class_ids == tgt, xc, 0.0), axis=0, keepdims=True)

    # Per-instance weighted loss; padded lanes carry weight 0 -> exact 0.
    loss_ref[...] = (jnp.log(sum_exp) - sel_c) * w       # lane-dense store


def _iw_ce_small_c(logits, target, weights):
    B, C = logits.shape
    itemsize = jnp.dtype(logits.dtype).itemsize

    # ~2 MiB of logits per grid step to amortize per-step overhead; multiple
    # of 128 lanes; never bigger than the (128-rounded) batch itself.
    b_tile = max(128, min(1 << 15, (1 << 21) // max(C * itemsize, 1)))
    b_tile = (b_tile // 128) * 128
    b_tile = min(b_tile, _round_up(B, 128))
    b_pad = _round_up(B, b_tile)
    n_tiles = b_pad // b_tile

    # Layout plumbing: batch-on-lanes, zero-padded tail (weight 0 => loss 0).
    logits_t = jnp.pad(logits.T, ((0, 0), (0, b_pad - B)))          # (C, B_pad)
    target_t = jnp.pad(target, (0, b_pad - B)).reshape(1, b_pad)    # (1, B_pad)
    weights_t = jnp.pad(weights, (0, b_pad - B)).reshape(1, b_pad)  # (1, B_pad)

    losses = pl.pallas_call(
        _iw_ce_lanes_kernel,
        out_shape=jax.ShapeDtypeStruct((1, b_pad), jnp.float32),
        grid_spec=pl.GridSpec(
            grid=(n_tiles,),
            in_specs=[
                pl.BlockSpec((C, b_tile), lambda i: (0, i)),
                pl.BlockSpec((1, b_tile), lambda i: (0, i)),
                pl.BlockSpec((1, b_tile), lambda i: (0, i)),
            ],
            out_specs=pl.BlockSpec((1, b_tile), lambda i: (0, i)),
        ),
        compiler_params=pltpu.CompilerParams(
            # Disjoint per-tile outputs -> safe to shard across TensorCores.
            dimension_semantics=("parallel",)),
    )(logits_t, target_t, weights_t)

    return jnp.sum(losses) / jnp.float32(B)


# --------------------------------------------------------------------------
# Large-C path: row-major batch tiling. logits (B_TILE, C), per-tile partial
# sum broadcast across 128 lanes so the store is unmasked / lane-dense.
# --------------------------------------------------------------------------
def _iw_ce_rows_kernel(logits_ref, target_ref, weights_ref, partial_ref):
    x = logits_ref[...].astype(jnp.float32)              # (Bt, C)
    tgt = target_ref[...]                                 # (Bt, 1) int32
    w = weights_ref[...].astype(jnp.float32)              # (Bt, 1)

    c = jnp.max(x, axis=1, keepdims=True)                 # (Bt, 1)
    xc = x - c
    sum_exp = jnp.sum(jnp.exp(xc), axis=1, keepdims=True)

    class_ids = lax.broadcasted_iota(jnp.int32, x.shape, dimension=1)
    sel_c = jnp.sum(jnp.where(class_ids == tgt, xc, 0.0), axis=1, keepdims=True)

    loss = (jnp.log(sum_exp) - sel_c) * w                  # (Bt, 1)
    partial_ref[...] = jnp.full((1, 128), jnp.sum(loss), dtype=jnp.float32)


def _iw_ce_large_c(logits, target, weights):
    B, C = logits.shape
    itemsize = jnp.dtype(logits.dtype).itemsize

    # ~4 MiB of logits per buffer -> ~8-10 MiB double-buffered, safe under the
    # default scoped VMEM on every generation (incl. v5e's 16 MiB).
    b_tile = max(8, (4 * 1024 * 1024) // max(C * itemsize, 1))
    b_tile = (b_tile // 8) * 8
    b_tile = min(b_tile, _round_up(B, 8))
    b_pad = _round_up(B, b_tile)
    n_tiles = b_pad // b_tile

    logits_p = jnp.pad(logits, ((0, b_pad - B), (0, 0)))
    target_p = jnp.pad(target, (0, b_pad - B)).reshape(b_pad, 1)
    weights_p = jnp.pad(weights, (0, b_pad - B)).reshape(b_pad, 1)

    partials = pl.pallas_call(
        _iw_ce_rows_kernel,
        out_shape=jax.ShapeDtypeStruct((n_tiles, 128), jnp.float32),
        grid_spec=pl.GridSpec(
            grid=(n_tiles,),
            in_specs=[
                pl.BlockSpec((b_tile, C), lambda i: (i, 0)),
                pl.BlockSpec((b_tile, 1), lambda i: (i, 0)),
                pl.BlockSpec((b_tile, 1), lambda i: (i, 0)),
            ],
            out_specs=pl.BlockSpec((1, 128), lambda i: (i, 0)),
        ),
        compiler_params=pltpu.CompilerParams(
            dimension_semantics=("parallel",)),
    )(logits_p, target_p, weights_p)

    return jnp.sum(partials[:, 0]) / jnp.float32(B)


# --------------------------------------------------------------------------
# Public wrapper (matches InstanceWeighetedCrossEntropyLoss.forward)
# --------------------------------------------------------------------------
def instance_weighted_ce_loss(logits, target, weights):
    """logits: (B, C); target: (B,) or (B, 1) int; weights: (B,) or (B, 1)."""
    B, C = logits.shape
    target = jnp.asarray(target).reshape(B).astype(jnp.int32)
    weights = jnp.asarray(weights).reshape(B)
    # NOTE: like the original kernel, out-of-range targets silently select 0
    # rather than raising as PyTorch would.
    if C <= 128:
        return _iw_ce_small_c(logits, target, weights)
    return _iw_ce_large_c(logits, target, weights)


def _reference(logits, target, weights):
    B = logits.shape[0]
    tgt = jnp.asarray(target).reshape(B).astype(jnp.int32)
    w = jnp.asarray(weights).reshape(B).astype(jnp.float32)
    lse = jax.scipy.special.logsumexp(logits.astype(jnp.float32), axis=1)
    sel = logits.astype(jnp.float32)[jnp.arange(B), tgt]
    return jnp.mean((lse - sel) * w)


if __name__ == "__main__":
    key = jax.random.PRNGKey(0)

    # Small-C case (e.g. gender classification: few classes, batch tiled on lanes).
    k1, k2, k3, k4, k5, k6 = jax.random.split(key, 6)
    B1, C1 = 16, 8
    logits1 = jax.random.normal(k1, (B1, C1), dtype=jnp.float32)
    target1 = jax.random.randint(k2, (B1, 1), 0, C1, dtype=jnp.int32)
    weights1 = jax.random.uniform(k3, (B1,), dtype=jnp.float32)

    out1 = jax.block_until_ready(instance_weighted_ce_loss(logits1, target1, weights1))
    ref1 = _reference(logits1, target1, weights1)
    assert jnp.allclose(out1, ref1, rtol=1e-5, atol=1e-5), (out1, ref1)

    # Large-C case (exercises the row-major batch-tiled path).
    B2, C2 = 24, 160
    logits2 = jax.random.normal(k4, (B2, C2), dtype=jnp.float32)
    target2 = jax.random.randint(k5, (B2, 1), 0, C2, dtype=jnp.int32)
    weights2 = jax.random.uniform(k6, (B2,), dtype=jnp.float32)

    out2 = jax.block_until_ready(instance_weighted_ce_loss(logits2, target2, weights2))
    ref2 = _reference(logits2, target2, weights2)
    assert jnp.allclose(out2, ref2, rtol=1e-5, atol=1e-5), (out2, ref2)

    print("KERNEL_OK")
</pallas_src>

<mosaic_0001>
module attributes {stable_mosaic.version = 11 : i64} {
  func.func @_iw_ce_lanes_kernel(%arg0: i32, %arg1: memref<8x128xf32, #tpu.memory_space<vmem>>, %arg2: memref<1x128xi32, #tpu.memory_space<vmem>>, %arg3: memref<1x128xf32, #tpu.memory_space<vmem>>, %arg4: memref<1x128xf32, #tpu.memory_space<vmem>>) attributes {dimension_semantics = [#tpu.dimension_semantics<parallel>], iteration_bounds = array<i64: 1>, scalar_prefetch = 0 : i64, scratch_operands = 0 : i64, tpu.core_type = #tpu.core_type<tc>, window_params = [{transform_indices = @transform_0, window_bounds = array<i64: 8, 128>}, {transform_indices = @transform_1, window_bounds = array<i64: 1, 128>}, {transform_indices = @transform_2, window_bounds = array<i64: 1, 128>}, {transform_indices = @transform_3, window_bounds = array<i64: 1, 128>}]} {
    %c0 = arith.constant 0 : index
    %c0_0 = arith.constant 0 : index
    %0 = vector.load %arg1[%c0, %c0_0] : memref<8x128xf32, #tpu.memory_space<vmem>>, vector<8x128xf32>
    %c0_1 = arith.constant 0 : index
    %c0_2 = arith.constant 0 : index
    %1 = vector.load %arg2[%c0_1, %c0_2] : memref<1x128xi32, #tpu.memory_space<vmem>>, vector<1x128xi32>
    %c0_3 = arith.constant 0 : index
    %c0_4 = arith.constant 0 : index
    %2 = vector.load %arg3[%c0_3, %c0_4] : memref<1x128xf32, #tpu.memory_space<vmem>>, vector<1x128xf32>
    %cst = arith.constant dense<0xFF800000> : vector<128xf32>
    %3 = vector.multi_reduction <maximumf>, %0, %cst [0] : vector<8x128xf32> to vector<128xf32>
    %4 = vector.shape_cast %3 : vector<128xf32> to vector<1x128xf32>
    %5 = vector.broadcast %4 : vector<1x128xf32> to vector<8x128xf32>
    %6 = arith.subf %0, %5 : vector<8x128xf32>
    %7 = math.exp %6 : vector<8x128xf32>
    %cst_5 = arith.constant dense<0.000000e+00> : vector<128xf32>
    %8 = vector.multi_reduction <add>, %7, %cst_5 [0] : vector<8x128xf32> to vector<128xf32>
    %9 = vector.shape_cast %8 : vector<128xf32> to vector<1x128xf32>
    %10 = tpu.iota {dimensions = array<i32: 0>} : vector<8x128xi32>
    %11 = vector.broadcast %1 : vector<1x128xi32> to vector<8x128xi32>
    %12 = arith.cmpi eq, %10, %11 : vector<8x128xi32>
    %cst_6 = arith.constant 0.000000e+00 : f32
    %13 = vector.broadcast %cst_6 : f32 to vector<8x128xf32>
    %14 = arith.select %12, %6, %13 : vector<8x128xi1>, vector<8x128xf32>
    %cst_7 = arith.constant dense<0.000000e+00> : vector<128xf32>
    %15 = vector.multi_reduction <add>, %14, %cst_7 [0] : vector<8x128xf32> to vector<128xf32>
    %16 = vector.shape_cast %15 : vector<128xf32> to vector<1x128xf32>
    %17 = math.log %9 : vector<1x128xf32>
    %18 = arith.subf %17, %16 : vector<1x128xf32>
    %19 = arith.mulf %18, %2 : vector<1x128xf32>
    %c0_8 = arith.constant 0 : index
    %c0_9 = arith.constant 0 : index
    %20 = vector.load %arg4[%c0_8, %c0_9] : memref<1x128xf32, #tpu.memory_space<vmem>>, vector<1x128xf32>
    tpu.vector_store %arg4[%c0_8, %c0_9], %19 {strides = array<i32>} : memref<1x128xf32, #tpu.memory_space<vmem>>, vector<1x128xf32>,
    return
  }
  func.func @transform_0(%arg0: i32) -> (i32, i32) {
    %c0_i32 = arith.constant 0 : i32
    %c0_i32_0 = arith.constant 0 : i32
    return %c0_i32, %arg0 : i32, i32
  }
  func.func @transform_1(%arg0: i32) -> (i32, i32) {
    %c0_i32 = arith.constant 0 : i32
    %c0_i32_0 = arith.constant 0 : i32
    return %c0_i32, %arg0 : i32, i32
  }
  func.func @transform_2(%arg0: i32) -> (i32, i32) {
    %c0_i32 = arith.constant 0 : i32
    %c0_i32_0 = arith.constant 0 : i32
    return %c0_i32, %arg0 : i32, i32
  }
  func.func @transform_3(%arg0: i32) -> (i32, i32) {
    %c0_i32 = arith.constant 0 : i32
    %c0_i32_0 = arith.constant 0 : i32
    return %c0_i32, %arg0 : i32, i32
  }
}

</mosaic_0001>

<llo_original>
// kernel: tpu_custom_call.1
$region0: #{tpu_custom_call.1}
  #allocation0 [shape = 'u32[]', space=smem, size = 0x4, offset = 0x4, fixed_abs, tag = 'smem constant byte address 0x4 - core index']
  #allocation1 [shape = 'u32[144,128]{1,0:T(1,128)}', space=vmem, size = 0x12000, scoped, tag = 'internal scratch']
  %s0 = inlined_call_operand.hbm [shape: f32[8,128], index: 0, kind: input, shape index: {}]
  %s1 = inlined_call_operand.vmem [shape: s32[1,128], index: 1, kind: input, shape index: {}]
  %s2 = inlined_call_operand.vmem [shape: f32[1,128], index: 2, kind: input, shape index: {}]
  %s3 = inlined_call_operand.hbm [shape: f32[1,128], index: 3, kind: output, shape index: {}]
  %s4 = sld [smem:[#allocation0]]
  $region26: #{tpu_custom_call.1} parent=0
    _
  %s6 = ssub.s32 1, %s4
  %s7 = scalar_select 0, %s6, %s4
  $region1: #{tpu_custom_call.1} parent=0
    #allocation2 [shape = 'u8[4096]{0}', space=vmem, size = 0x1000, scoped, tag = 'input window, operand 0, single buffered']
    #allocation3 [shape = 's32[1]{0}', space=sflag, size = 0x4, scoped, tag = 'scoped memory for tpu_custom_call.1']
    #allocation4 [shape = 's32[1]{0}', space=sflag, size = 0x4, scoped, tag = 'scoped memory for tpu_custom_call.1']
    #allocation5 [shape = 'u8[512]{0}', space=vmem, size = 0x400, scoped, tag = 'output window, operand 0, single buffered']
    %8 = vsyncpa [#allocation3], 0
    %9 = vsyncpa [#allocation4], 0
    // Predicated region
    $region2: #{tpu_custom_call.1} parent=1 // pred_check
      _
    $region3: #{tpu_custom_call.1} parent=1 // pred_check_branch
      %11 = sbr.rel (0) target = $region5
    $region4: #{tpu_custom_call.1} parent=1 // pred_region
      %s13 = ssub.s32 128, 128
      %14 = vsyncadd [#allocation3], %s13
      %s16 = sshll.u32 [#allocation2], 4
      %s17 = int_to_ptr.vmem [resolvable:$true] %s16
      %19 = dma.hbm_to_vmem [thread:$0]  %s0, 128, %s17, [#allocation3]
    $region5: #{tpu_custom_call.1} parent=1 // pred_fallthru
      _
    // Predicated region
    $region6: #{tpu_custom_call.1} parent=1 // pred_check
      _
    $region7: #{tpu_custom_call.1} parent=1 // pred_check_branch
      %21 = sbr.rel (0) target = $region9
    $region8: #{tpu_custom_call.1} parent=1 // pred_region
      _
    $region9: #{tpu_custom_call.1} parent=1 // pred_fallthru
      _
    // Predicated region
    $region10: #{tpu_custom_call.1} parent=1 // pred_check
      _
    $region11: #{tpu_custom_call.1} parent=1 // pred_check_branch
      %23 = sbr.rel (0) target = $region13
    $region12: #{tpu_custom_call.1} parent=1 // pred_region
      _
    $region13: #{tpu_custom_call.1} parent=1 // pred_fallthru
      _
    // Predicated region
    $region14: #{tpu_custom_call.1} parent=1 // pred_check
      _
    $region15: #{tpu_custom_call.1} parent=1 // pred_check_branch
      %25 = sbr.rel (0) target = $region17
    $region16: #{tpu_custom_call.1} parent=1 // pred_region
      %26 = dma.done [#allocation3], 128
    $region17: #{tpu_custom_call.1} parent=1 // pred_fallthru
      _
    %v27 = vld [vmem:[#allocation2] sm:$0xff]
    %v28 = vld [vmem:[%s1] sm:$0x1]
    %v29 = vld [vmem:[%s2] sm:$0x1]
    %v30 = vrot.slane %v27, 4
    %v31 = vmax.f32 %v27, %v30
    %v32 = vrot.slane %v31, 2
    %v33 = vmax.f32 %v31, %v32
    %v34 = vrot.slane %v33, 1
    %v35 = vmax.f32 %v33, %v34
    %v36 = vsub.f32 %v27, %v35
    %v37 = vmul.f32 %v36, 1.442695
    %v38 = vpow.pop %v37
    %v39 = vrot.slane %v38, 4
    %v40 = vadd.f32 %v38, %v39
    %v41 = vrot.slane %v40, 2
    %v42 = vadd.f32 %v40, %v41
    %v43 = vrot.slane %v42, 1
    %v44 = vadd.f32 %v42, %v43
    %v45 = vlaneseq
    %v46 = vshrl.u32 %v45, 7
    %v47 = vlaneseq
    %v48 = vshrl.u32 %v47, 7
    %v49 = vsub.s32 0, %v48
    %v50 = vrot.slane %v28, %v49
    %vm51 = vcmp.eq.s32.totalorder %v46, %v50
    %v52 = vsel %vm51, %v36, 0.0
    %v53 = vrot.slane %v52, 4
    %v54 = vadd.f32 %v52, %v53
    %v55 = vrot.slane %v54, 2
    %v56 = vadd.f32 %v54, %v55
    %v57 = vrot.slane %v56, 1
    %v58 = vadd.f32 %v56, %v57
    %v59 = vlog2.pop %v44
    %v60 = vmul.f32 %v59, 0.6931472
    %v61 = vsub.f32 %v60, %v58
    %v62 = vmul.f32 %v61, %v29
    %63 = vst [vmem:[#allocation5] sm:$0x1] %v62
    // Predicated region
    $region18: #{tpu_custom_call.1} parent=1 // pred_check
      _
    $region19: #{tpu_custom_call.1} parent=1 // pred_check_branch
      %65 = sbr.rel (0) target = $region21
    $region20: #{tpu_custom_call.1} parent=1 // pred_region
      %s67 = ssub.s32 16, 16
      %68 = vsyncadd [#allocation4], %s67
      %s70 = sshll.u32 [#allocation5], 4
      %s71 = int_to_ptr.vmem [resolvable:$true] %s70
      %73 = dma.vmem_to_hbm [thread:$0]  %s71, 16, %s3, [#allocation4]
    $region21: #{tpu_custom_call.1} parent=1 // pred_fallthru
      _
    // Predicated region
    $region22: #{tpu_custom_call.1} parent=1 // pred_check
      _
    $region23: #{tpu_custom_call.1} parent=1 // pred_check_branch
      %75 = sbr.rel (0) target = $region25
    $region24: #{tpu_custom_call.1} parent=1 // pred_region
      %76 = dma.done [#allocation4], 16
    $region25: #{tpu_custom_call.1} parent=1 // pred_fallthru
      _
    %77 = vsyncpa [#allocation3], 1
    %78 = vsyncpa [#allocation4], 1

</llo_original>
